<compile_context>
chip_gen: v7x
topology: tpu7x:2x2x1
jax: 0.10.0
libtpu: 0.0.40
codegen_flags: <defaults>
</compile_context>

<pallas_src>
import functools

import jax
import jax.numpy as jnp
from jax.experimental import pallas as pl
from jax.experimental.pallas import tpu as pltpu


def _se_kernel(x_ref, w1_ref, b1_ref, w2_ref, b2_ref, o_ref, *, inv_hw):
    """Fused SE block for one batch block.

    x_ref  : (Bt, C, HWp)  input activations (HWp lane-aligned, zero-padded)
    w1_ref : (C, Ch)       fc1 weight, pre-transposed to (in, out)
    b1_ref : (1, Ch)       fc1 bias
    w2_ref : (Ch, C)       fc2 weight, pre-transposed
    b2_ref : (1, C)        fc2 bias
    o_ref  : (Bt, C, HWp)  output = x * sigmoid(fc2(relu(fc1(mean_hw(x)))))
    """
    x = x_ref[...]                                          # (Bt, C, HWp), native dtype
    # Squeeze: global average pool over the spatial (lane) axis; f32 accumulate.
    # Divide by the *true* HW — the padded lanes are zeros, so the sum is exact.
    y = jnp.sum(x, axis=-1, dtype=jnp.float32) * inv_hw             # (Bt, C)
    # Excite: fc1 -> relu -> fc2 -> sigmoid; tiny matmuls, f32 accumulate.
    h = jnp.dot(y, w1_ref[...], preferred_element_type=jnp.float32) + b1_ref[...]
    h = jnp.maximum(h, 0.0)                                          # (Bt, Ch)
    s = jnp.dot(h, w2_ref[...], preferred_element_type=jnp.float32) + b2_ref[...]
    s = jax.nn.sigmoid(s)                                            # (Bt, C), f32
    # Scale: cast the gate down to the activation dtype first so sub-f32
    # activations are multiplied at their native width (no f32 promotion of the
    # whole (Bt, C, HWp) block in vregs).
    gate = s.astype(x.dtype)
    o_ref[...] = (x * gate[:, :, None]).astype(o_ref.dtype)


def _vmem_capacity_bytes():
    """Per-core VMEM capacity; conservative fallback if the query fails."""
    try:
        return int(pltpu.get_tpu_info().vmem_capacity_bytes)
    except Exception:
        return 64 << 20   # v7x per-TensorCore VMEM (smallest of the three gens)


def _choose_block_batch(B, bytes_per_image, vmem_budget):
    """Pick how many images to process per grid step."""
    target = 4 << 20                                        # ~4 MiB input blocks
    bt = max(1, min(B, target // max(1, bytes_per_image)))
    # Double-buffered input + double-buffered output blocks must fit the budget.
    max_bt_vmem = max(1, vmem_budget // (4 * max(1, bytes_per_image)))
    bt = min(bt, max_bt_vmem)
    # Keep >= 4 grid steps (2 per TC on v7x megacore) unless that would shrink
    # blocks below ~1 MiB, where per-step overhead starts dominating again.
    if B >= 4:
        bt_grid4 = max(1, B // 4)
        if bt_grid4 * bytes_per_image >= (1 << 20):
            bt = min(bt, bt_grid4)
    return bt


@functools.partial(jax.jit, donate_argnums=(0,))
def se_block(x, w1, b1, w2, b2):
    """x: (B, C, H, W) NCHW; params follow torch.nn.Linear conventions:
    w1: (C//ratio, C), b1: (C//ratio,), w2: (C, C//ratio), b2: (C,).

    NOTE: x is donated and the kernel output aliases its HBM slab; copy x
    beforehand if the pre-SE activation is still needed (e.g. a residual)."""
    B, C, H, W = x.shape
    Ch = w1.shape[0]
    HW = H * W
    HWp = ((HW + 127) // 128) * 128          # lane-align the spatial axis
    itemsize = jnp.dtype(x.dtype).itemsize

    vmem_cap = (_vmem_capacity_bytes() * 3) // 4   # ~48 MiB v7x, ~96 MiB v5e/v6e
    bytes_per_image = C * HWp * itemsize
    bt = _choose_block_batch(B, bytes_per_image, vmem_cap - (8 << 20))
    n_blocks = pl.cdiv(B, bt)
    Bp = n_blocks * bt

    x_flat = x.reshape(B, C, HW)
    if Bp != B or HWp != HW:
        # Zero padding keeps the squeeze sum exact (true-HW divisor in-kernel)
        # and keeps the x/out block last dims lane-dense (unmasked stores).
        x_flat = jnp.pad(x_flat, ((0, Bp - B), (0, 0), (0, HWp - HW)))

    w1_t = w1.T                      # (C, Ch): (in_features, out_features)
    w2_t = w2.T                      # (Ch, C)
    b1_2d = b1.reshape(1, Ch)
    b2_2d = b2.reshape(1, C)

    # VMEM limit from the real working set: double-buffered (aliased) in/out
    # blocks + the tiny FC params + headroom, capped at 3/4 of physical VMEM.
    block_bytes = bt * C * HWp * itemsize
    param_bytes = (2 * C * Ch + C + Ch) * jnp.dtype(w1.dtype).itemsize
    needed = 4 * block_bytes + 2 * param_bytes + (4 << 20)
    vmem_limit = int(min(vmem_cap, max(needed, 32 << 20)))
    # TODO(synk): if a single (C, HWp) image slab alone blows the VMEM budget
    # (bt == 1 and 4*block_bytes > vmem_cap — triggers ~2x earlier on v7x),
    # switch to one pallas_call per batch block with memory_space=pl.ANY on x
    # and a fused two-pass inner loop over HW chunks (pass 1: accumulate
    # per-channel sums and compute the gate in VMEM; pass 2: stream the chunks
    # again and scale), instead of two separate pallas_calls.

    kernel = functools.partial(_se_kernel, inv_hw=1.0 / HW)

    out_flat = pl.pallas_call(
        kernel,
        out_shape=jax.ShapeDtypeStruct((Bp, C, HWp), x.dtype),
        grid=(n_blocks,),
        in_specs=[
            pl.BlockSpec((bt, C, HWp), lambda b: (b, 0, 0)),
            pl.BlockSpec((C, Ch), lambda b: (0, 0)),
            pl.BlockSpec((1, Ch), lambda b: (0, 0)),
            pl.BlockSpec((Ch, C), lambda b: (0, 0)),
            pl.BlockSpec((1, C), lambda b: (0, 0)),
        ],
        out_specs=pl.BlockSpec((bt, C, HWp), lambda b: (b, 0, 0)),
        input_output_aliases={0: 0},          # output reuses x_flat's HBM slab
        compiler_params=pltpu.CompilerParams(
            dimension_semantics=("parallel",),
            vmem_limit_bytes=vmem_limit,
        ),
    )(x_flat, w1_t, b1_2d, w2_t, b2_2d)

    if Bp != B or HWp != HW:
        out_flat = out_flat[:B, :, :HW]
    return out_flat.reshape(B, C, H, W)


def _reference(x, w1, b1, w2, b2):
    """Pure-JAX reference mirroring the PyTorch forward exactly."""
    y = jnp.mean(x, axis=(2, 3))                      # adaptive avg pool -> (B, C)
    y = jnp.maximum(y @ w1.T + b1, 0.0)               # relu(fc1(y))
    y = jax.nn.sigmoid(y @ w2.T + b2)                 # sigmoid(fc2(y))
    return x * y[:, :, None, None]


if __name__ == "__main__":
    # SEBlock(in_channels=32, ratio=16) -> hidden = 2
    B, C, H, W = 2, 32, 16, 16
    ratio = 16
    Ch = C // ratio

    key = jax.random.PRNGKey(0)
    kx, kw1, kb1, kw2, kb2 = jax.random.split(key, 5)

    x = jax.random.normal(kx, (B, C, H, W), dtype=jnp.float32)

    # Deterministic param init (uniform ±1/sqrt(fan_in), like nn.Linear default).
    lim1 = 1.0 / jnp.sqrt(jnp.float32(C))
    lim2 = 1.0 / jnp.sqrt(jnp.float32(Ch))
    w1 = jax.random.uniform(kw1, (Ch, C), jnp.float32, -lim1, lim1)
    b1 = jax.random.uniform(kb1, (Ch,), jnp.float32, -lim1, lim1)
    w2 = jax.random.uniform(kw2, (C, Ch), jnp.float32, -lim2, lim2)
    b2 = jax.random.uniform(kb2, (C,), jnp.float32, -lim2, lim2)

    # Reference computed BEFORE the kernel call: x is donated (aliased in-place).
    ref = jax.block_until_ready(_reference(x, w1, b1, w2, b2))

    out = jax.block_until_ready(se_block(x, w1, b1, w2, b2))

    assert out.shape == (B, C, H, W)
    assert jnp.allclose(out, ref, atol=1e-5, rtol=1e-5), "mismatch vs reference"

    print("KERNEL_OK")
</pallas_src>

<mosaic_0001>
module attributes {stable_mosaic.version = 11 : i64} {
  func.func @_se_kernel(%arg0: i32, %arg1: memref<2x32x256xf32, #tpu.memory_space<vmem>>, %arg2: memref<32x2xf32, #tpu.memory_space<vmem>>, %arg3: memref<1x2xf32, #tpu.memory_space<vmem>>, %arg4: memref<2x32xf32, #tpu.memory_space<vmem>>, %arg5: memref<1x32xf32, #tpu.memory_space<vmem>>, %arg6: memref<2x32x256xf32, #tpu.memory_space<vmem>>) attributes {dimension_semantics = [#tpu.dimension_semantics<parallel>], iteration_bounds = array<i64: 1>, scalar_prefetch = 0 : i64, scratch_operands = 0 : i64, tpu.core_type = #tpu.core_type<tc>, window_params = [{transform_indices = @transform_0, window_bounds = array<i64: 2, 32, 256>}, {pipeline_mode = #tpu.pipeline_mode<synchronous>, transform_indices = @transform_1, window_bounds = array<i64: 32, 2>}, {pipeline_mode = #tpu.pipeline_mode<synchronous>, transform_indices = @transform_2, window_bounds = array<i64: 1, 2>}, {pipeline_mode = #tpu.pipeline_mode<synchronous>, transform_indices = @transform_3, window_bounds = array<i64: 2, 32>}, {pipeline_mode = #tpu.pipeline_mode<synchronous>, transform_indices = @transform_4, window_bounds = array<i64: 1, 32>}, {transform_indices = @transform_5, window_bounds = array<i64: 2, 32, 256>}]} {
    %c0 = arith.constant 0 : index
    %c0_0 = arith.constant 0 : index
    %c0_1 = arith.constant 0 : index
    %0 = vector.load %arg1[%c0, %c0_0, %c0_1] : memref<2x32x256xf32, #tpu.memory_space<vmem>>, vector<2x32x256xf32>
    %cst = arith.constant dense<0.000000e+00> : vector<2x32xf32>
    %1 = vector.multi_reduction <add>, %0, %cst [2] : vector<2x32x256xf32> to vector<2x32xf32>
    %cst_2 = arith.constant 3.906250e-03 : f32
    %2 = vector.broadcast %cst_2 : f32 to vector<2x32xf32>
    %3 = arith.mulf %1, %2 : vector<2x32xf32>
    %c0_3 = arith.constant 0 : index
    %c0_4 = arith.constant 0 : index
    %4 = vector.load %arg2[%c0_3, %c0_4] : memref<32x2xf32, #tpu.memory_space<vmem>>, vector<32x2xf32>
    %cst_5 = arith.constant dense<0.000000e+00> : vector<2x2xf32>
    %5 = tpu.matmul %3, %4, %cst_5 {dimension_numbers = #tpu.dot_dimension_numbers<[1], [0], [0], [1], [0, 0, 1, 1], [], []>} : vector<2x32xf32>, vector<32x2xf32>, vector<2x2xf32> -> vector<2x2xf32>
    %c0_6 = arith.constant 0 : index
    %c0_7 = arith.constant 0 : index
    %6 = vector.load %arg3[%c0_6, %c0_7] : memref<1x2xf32, #tpu.memory_space<vmem>>, vector<1x2xf32>
    %7 = vector.broadcast %6 : vector<1x2xf32> to vector<2x2xf32>
    %8 = arith.addf %5, %7 : vector<2x2xf32>
    %cst_8 = arith.constant 0.000000e+00 : f32
    %9 = vector.broadcast %cst_8 : f32 to vector<2x2xf32>
    %10 = arith.maximumf %8, %9 : vector<2x2xf32>
    %c0_9 = arith.constant 0 : index
    %c0_10 = arith.constant 0 : index
    %11 = vector.load %arg4[%c0_9, %c0_10] : memref<2x32xf32, #tpu.memory_space<vmem>>, vector<2x32xf32>
    %cst_11 = arith.constant dense<0.000000e+00> : vector<2x32xf32>
    %12 = tpu.matmul %10, %11, %cst_11 {dimension_numbers = #tpu.dot_dimension_numbers<[1], [0], [0], [1], [0, 0, 1, 1], [], []>} : vector<2x2xf32>, vector<2x32xf32>, vector<2x32xf32> -> vector<2x32xf32>
    %c0_12 = arith.constant 0 : index
    %c0_13 = arith.constant 0 : index
    %13 = vector.load %arg5[%c0_12, %c0_13] : memref<1x32xf32, #tpu.memory_space<vmem>>, vector<1x32xf32>
    %14 = vector.broadcast %13 : vector<1x32xf32> to vector<2x32xf32>
    %15 = arith.addf %12, %14 : vector<2x32xf32>
    %16 = arith.negf %15 : vector<2x32xf32>
    %17 = math.exp %16 : vector<2x32xf32>
    %cst_14 = arith.constant 1.000000e+00 : f32
    %18 = vector.broadcast %cst_14 : f32 to vector<2x32xf32>
    %19 = arith.addf %18, %17 : vector<2x32xf32>
    %20 = arith.divf %18, %19 : vector<2x32xf32>
    %21 = vector.shape_cast %20 : vector<2x32xf32> to vector<2x32x1xf32>
    %22 = vector.broadcast %21 : vector<2x32x1xf32> to vector<2x32x256xf32>
    %23 = arith.mulf %0, %22 : vector<2x32x256xf32>
    %c0_15 = arith.constant 0 : index
    %c0_16 = arith.constant 0 : index
    %c0_17 = arith.constant 0 : index
    %24 = vector.load %arg6[%c0_15, %c0_16, %c0_17] : memref<2x32x256xf32, #tpu.memory_space<vmem>>, vector<2x32x256xf32>
    tpu.vector_store %arg6[%c0_15, %c0_16, %c0_17], %23 {strides = array<i32>} : memref<2x32x256xf32, #tpu.memory_space<vmem>>, vector<2x32x256xf32>,
    return
  }
  func.func @transform_0(%arg0: i32) -> (i32, i32, i32) {
    %c0_i32 = arith.constant 0 : i32
    %c0_i32_0 = arith.constant 0 : i32
    %c0_i32_1 = arith.constant 0 : i32
    return %arg0, %c0_i32, %c0_i32_0 : i32, i32, i32
  }
  func.func @transform_1(%arg0: i32) -> (i32, i32) {
    %c0_i32 = arith.constant 0 : i32
    %c0_i32_0 = arith.constant 0 : i32
    %c0_i32_1 = arith.constant 0 : i32
    return %c0_i32, %c0_i32_0 : i32, i32
  }
  func.func @transform_2(%arg0: i32) -> (i32, i32) {
    %c0_i32 = arith.constant 0 : i32
    %c0_i32_0 = arith.constant 0 : i32
    %c0_i32_1 = arith.constant 0 : i32
    return %c0_i32, %c0_i32_0 : i32, i32
  }
  func.func @transform_3(%arg0: i32) -> (i32, i32) {
    %c0_i32 = arith.constant 0 : i32
    %c0_i32_0 = arith.constant 0 : i32
    %c0_i32_1 = arith.constant 0 : i32
    return %c0_i32, %c0_i32_0 : i32, i32
  }
  func.func @transform_4(%arg0: i32) -> (i32, i32) {
    %c0_i32 = arith.constant 0 : i32
    %c0_i32_0 = arith.constant 0 : i32
    %c0_i32_1 = arith.constant 0 : i32
    return %c0_i32, %c0_i32_0 : i32, i32
  }
  func.func @transform_5(%arg0: i32) -> (i32, i32, i32) {
    %c0_i32 = arith.constant 0 : i32
    %c0_i32_0 = arith.constant 0 : i32
    %c0_i32_1 = arith.constant 0 : i32
    return %arg0, %c0_i32, %c0_i32_0 : i32, i32, i32
  }
}

</mosaic_0001>

<llo_original>
// kernel: se_block.1
$region0: #{se_block.1}
  #allocation0 [shape = 'u32[]', space=smem, size = 0x4, offset = 0x4, fixed_abs, tag = 'smem constant byte address 0x4 - core index']
  #allocation1 [shape = 'u32[144,128]{1,0:T(1,128)}', space=vmem, size = 0x12000, scoped, tag = 'internal scratch']
  %s0 = inlined_call_operand.vmem [shape: f32[2,32,256], index: 0, kind: input, shape index: {}, may-alias: {0,5}]
  %s1 = inlined_call_operand.vmem [shape: f32[32,2], index: 1, kind: input, shape index: {}]
  %s2 = inlined_call_operand.vmem [shape: f32[1,2], index: 2, kind: input, shape index: {}]
  %s3 = inlined_call_operand.vmem [shape: f32[2,32], index: 3, kind: input, shape index: {}]
  %s4 = inlined_call_operand.vmem [shape: f32[1,32], index: 4, kind: input, shape index: {}]
  %s5 = inlined_call_operand.vmem [shape: f32[2,32,256], index: 5, kind: output, shape index: {}, may-alias: {0,5}]
  %s6 = sld [smem:[#allocation0]]
  $region30: #{se_block.1} parent=0
    _
  %s8 = ssub.s32 1, %s6
  %s9 = scalar_select 0, %s8, %s6
  // Predicated region
  $region2: #{se_block.1} parent=0 // pred_check
    _
  $region3: #{se_block.1} parent=0 // pred_check_branch
    %11 = sbr.rel (0) target = $region5
  $region4: #{se_block.1} parent=0 // pred_region
    _
  $region5: #{se_block.1} parent=0 // pred_fallthru
    _
  // Predicated region
  $region6: #{se_block.1} parent=0 // pred_check
    _
  $region7: #{se_block.1} parent=0 // pred_check_branch
    %13 = sbr.rel (0) target = $region9
  $region8: #{se_block.1} parent=0 // pred_region
    _
  $region9: #{se_block.1} parent=0 // pred_fallthru
    _
  // Predicated region
  $region10: #{se_block.1} parent=0 // pred_check
    _
  $region11: #{se_block.1} parent=0 // pred_check_branch
    %15 = sbr.rel (0) target = $region13
  $region12: #{se_block.1} parent=0 // pred_region
    _
  $region13: #{se_block.1} parent=0 // pred_fallthru
    _
  // Predicated region
  $region14: #{se_block.1} parent=0 // pred_check
    _
  $region15: #{se_block.1} parent=0 // pred_check_branch
    %17 = sbr.rel (0) target = $region17
  $region16: #{se_block.1} parent=0 // pred_region
    _
  $region17: #{se_block.1} parent=0 // pred_fallthru
    _
  // Predicated region
  $region18: #{se_block.1} parent=0 // pred_check
    _
  $region19: #{se_block.1} parent=0 // pred_check_branch
    %19 = sbr.rel (0) target = $region21
  $region20: #{se_block.1} parent=0 // pred_region
    _
  $region21: #{se_block.1} parent=0 // pred_fallthru
    _
  %v20 = vld [vmem:[%s0] sm:$0xff]
  %v21 = vld [vmem:[%s0 + $0x8] sm:$0xff]
  %v22 = vld [vmem:[%s0 + $0x10] sm:$0xff]
  %v23 = vld [vmem:[%s0 + $0x18] sm:$0xff]
  %v24 = vld [vmem:[%s0 + $0x20] sm:$0xff]
  %v25 = vld [vmem:[%s0 + $0x28] sm:$0xff]
  %v26 = vld [vmem:[%s0 + $0x30] sm:$0xff]
  %v27 = vld [vmem:[%s0 + $0x38] sm:$0xff]
  %v28 = vld [vmem:[%s0 + $0x40] sm:$0xff]
  %v29 = vld [vmem:[%s0 + $0x48] sm:$0xff]
  %v30 = vld [vmem:[%s0 + $0x50] sm:$0xff]
  %v31 = vld [vmem:[%s0 + $0x58] sm:$0xff]
  %v32 = vld [vmem:[%s0 + $0x60] sm:$0xff]
  %v33 = vld [vmem:[%s0 + $0x68] sm:$0xff]
  %v34 = vld [vmem:[%s0 + $0x70] sm:$0xff]
  %v35 = vld [vmem:[%s0 + $0x78] sm:$0xff]
  %v36 = vadd.f32 %v20, %v21
  %37 = vadd.xlane.f32.xlu0 %v36
  %v38 = vpop.xlane.xlu0 %37
  %v39 = vadd.f32 %v22, %v23
  %40 = vadd.xlane.f32.xlu0 %v39
  %v41 = vpop.xlane.xlu0 %40
  %v42 = vadd.f32 %v24, %v25
  %43 = vadd.xlane.f32.xlu0 %v42
  %v44 = vpop.xlane.xlu0 %43
  %v45 = vadd.f32 %v26, %v27
  %46 = vadd.xlane.f32.xlu0 %v45
  %v47 = vpop.xlane.xlu0 %46
  %v48 = vadd.f32 %v28, %v29
  %49 = vadd.xlane.f32.xlu0 %v48
  %v50 = vpop.xlane.xlu0 %49
  %v51 = vadd.f32 %v30, %v31
  %52 = vadd.xlane.f32.xlu0 %v51
  %v53 = vpop.xlane.xlu0 %52
  %v54 = vadd.f32 %v32, %v33
  %55 = vadd.xlane.f32.xlu0 %v54
  %v56 = vpop.xlane.xlu0 %55
  %v57 = vadd.f32 %v34, %v35
  %58 = vadd.xlane.f32.xlu0 %v57
  %v59 = vpop.xlane.xlu0 %58
  %v60 = vmul.f32 %v38, 0.00390625
  %v61 = vmul.f32 %v41, 0.00390625
  %v62 = vmul.f32 %v44, 0.00390625
  %v63 = vmul.f32 %v47, 0.00390625
  %v64 = vmul.f32 %v50, 0.00390625
  %v65 = vmul.f32 %v53, 0.00390625
  %v66 = vmul.f32 %v56, 0.00390625
  %v67 = vmul.f32 %v59, 0.00390625
  %v68 = vld [vmem:[%s1] sm:$0xff]
  %v69 = vld [vmem:[%s1 + $0x8] sm:$0xff]
  %v70 = vld [vmem:[%s1 + $0x10] sm:$0xff]
  %v71 = vld [vmem:[%s1 + $0x18] sm:$0xff]
  %v72 = vld [vmem:[%s2] sm:$0x1]
  %v74 = vlaneseq
  %v75 = vshrl.u32 %v74, 7
  %v76 = vsub.s32 0, %v75
  %v77 = vrot.slane %v72, %v76
  %v87 = vlaneseq
  %v88 = vand.u32 %v87, 127
  %v89 = vlaneseq
  %v90 = vshrl.u32 %v89, 7
  %v91 = vsub.s32 %v88, %v90
  %v92 = vrot.slane %v60, %v91
  %v93 = vadd.s32 %v88, 4294967288
  %v94 = vlaneseq
  %v95 = vshrl.u32 %v94, 7
  %v96 = vsub.s32 %v93, %v95
  %v97 = vrot.slane %v61, %v96
  %vm98 = vcmask 130112
  %v99 = vsel %vm98, %v97, %v92
  %v100 = vadd.s32 %v88, 4294967280
  %v101 = vlaneseq
  %v102 = vshrl.u32 %v101, 7
  %v103 = vsub.s32 %v100, %v102
  %v104 = vrot.slane %v62, %v103
  %vm105 = vcmask 195712
  %v106 = vsel %vm105, %v104, %v99
  %v107 = vadd.s32 %v88, 4294967272
  %v108 = vlaneseq
  %v109 = vshrl.u32 %v108, 7
  %v110 = vsub.s32 %v107, %v109
  %v111 = vrot.slane %v63, %v110
  %vm112 = vcmask 261312
  %v113 = vsel %vm112, %v111, %v106
  %v114 = vlaneseq
  %v115 = vshrl.u32 %v114, 7
  %v116 = vsub.s32 %v88, %v115
  %v117 = vrot.slane %v64, %v116
  %v118 = vlaneseq
  %v119 = vshrl.u32 %v118, 7
  %v120 = vsub.s32 %v93, %v119
  %v121 = vrot.slane %v65, %v120
  %v122 = vsel %vm98, %v121, %v117
  %v123 = vlaneseq
  %v124 = vshrl.u32 %v123, 7
  %v125 = vsub.s32 %v100, %v124
  %v126 = vrot.slane %v66, %v125
  %v127 = vsel %vm105, %v126, %v122
  %v128 = vlaneseq
  %v129 = vshrl.u32 %v128, 7
  %v130 = vsub.s32 %v107, %v129
  %v131 = vrot.slane %v67, %v130
  %v132 = vsel %vm112, %v131, %v127
  %vm133 = vcmask 1041409
  %v134 = vsel %vm133, %v132, %v113
  %vm135 = vcmask 261120
  %v136 = vsel %vm135, %v134, 0
  %138 = vmatprep.subr.mxu0 0.0
  %139 = vmatpush1.msra.mxu0 %v68
  %140 = vmatprep.subr.mxu0 0.0
  %141 = vmatpush1.msra.mxu0 %v69
  %142 = vmatprep.subr.mxu0 0.0
  %143 = vmatpush1.msra.mxu0 %v70
  %144 = vmatprep.subr.mxu0 0.0
  %145 = vmatpush1.msra.mxu0 %v71
  %146 = vmatprep.subr.mxu0 0.0
  %147 = vmatpush1.msra.mxu0 0.0
  %148 = vmatprep.subr.mxu0 0.0
  %149 = vmatpush1.msra.mxu0 0.0
  %150 = vmatprep.subr.mxu0 0.0
  %151 = vmatpush1.msra.mxu0 0.0
  %152 = vmatprep.subr.mxu0 0.0
  %153 = vmatpush1.msra.mxu0 0.0
  %154 = vmatprep.subr.mxu0 0.0
  %155 = vmatpush1.msra.mxu0 0.0
  %156 = vmatprep.subr.mxu0 0.0
  %157 = vmatpush1.msra.mxu0 0.0
  %158 = vmatprep.subr.mxu0 0.0
  %159 = vmatpush1.msra.mxu0 0.0
  %160 = vmatprep.subr.mxu0 0.0
  %161 = vmatpush1.msra.mxu0 0.0
  %162 = vmatprep.subr.mxu0 0.0
  %163 = vmatpush1.msra.mxu0 0.0
  %164 = vmatprep.subr.mxu0 0.0
  %165 = vmatpush1.msra.mxu0 0.0
  %166 = vmatprep.subr.mxu0 0.0
  %167 = vmatpush1.msra.mxu0 0.0
  %168 = vmatprep.subr.mxu0 0.0
  %169 = vmatpush1.msra.mxu0 0.0
  %170 = vmatprep.subr.mxu0 0.0
  %171 = vmatpush1.msra.mxu0 0.0
  %172 = vmatprep.subr.mxu0 0.0
  %173 = vmatpush1.msra.mxu0 0.0
  %174 = vmatprep.subr.mxu0 0.0
  %175 = vmatpush1.msra.mxu0 0.0
  %176 = vmatprep.subr.mxu0 0.0
  %177 = vmatpush1.msra.mxu0 0.0
  %178 = vmatprep.subr.mxu0 0.0
  %179 = vmatpush1.msra.mxu0 0.0
  %180 = vmatprep.subr.mxu0 0.0
  %181 = vmatpush1.msra.mxu0 0.0
  %182 = vmatprep.subr.mxu0 0.0
  %183 = vmatpush1.msra.mxu0 0.0
  %184 = vmatprep.subr.mxu0 0.0
  %185 = vmatpush1.msra.mxu0 0.0
  %186 = vmatprep.subr.mxu0 0.0
  %187 = vmatpush1.msra.mxu0 0.0
  %188 = vmatprep.subr.mxu0 0.0
  %189 = vmatpush1.msra.mxu0 0.0
  %190 = vmatprep.subr.mxu0 0.0
  %191 = vmatpush1.msra.mxu0 0.0
  %192 = vmatprep.subr.mxu0 0.0
  %193 = vmatpush1.msra.mxu0 0.0
  %194 = vmatprep.subr.mxu0 0.0
  %195 = vmatpush1.msra.mxu0 0.0
  %196 = vmatprep.subr.mxu0 0.0
  %197 = vmatpush1.msra.mxu0 0.0
  %198 = vmatprep.subr.mxu0 0.0
  %199 = vmatpush1.msra.mxu0 0.0
  %200 = vmatprep.subr.mxu0 0.0
  %201 = vmatpush1.msra.mxu0 0.0
  %202 = vmatprep.mubr.f32.mxu0 0.0
  %203 = vmatmul.mubr.f32.gmra.mrb[0].mxu0 %v136
  %v204 = vpop.f32.mrb[0].mxu0
  %v205 = vadd.f32 %v77, %v204
  %v206 = vpop.f32.mrb[0].mxu0
  %207 = vdwg.mxu0
  %v208 = vmax.f32 %v205, 0.0
  %v209 = vld [vmem:[%s3] sm:$0x3]
  %v210 = vld [vmem:[%s4] sm:$0x1]
  %v212 = vlaneseq
  %v213 = vshrl.u32 %v212, 7
  %v214 = vsub.s32 0, %v213
  %v215 = vrot.slane %v210, %v214
  %vm217 = vcmask 15360
  %v219 = vsel %vm217, %v208, 0
  %vm221 = vcmask 1041408
  %v223 = vsel %vm221, %v209, 0
  %225 = vmatprep.subr.mxu0 0.0
  %226 = vmatpush1.msra.mxu0 %v223
  %227 = vmatprep.subr.mxu0 0.0
  %228 = vmatpush1.msra.mxu0 0.0
  %229 = vmatprep.subr.mxu0 0.0
  %230 = vmatpush1.msra.mxu0 0.0
  %231 = vmatprep.subr.mxu0 0.0
  %232 = vmatpush1.msra.mxu0 0.0
  %233 = vmatprep.subr.mxu0 0.0
  %234 = vmatpush1.msra.mxu0 0.0
  %235 = vmatprep.subr.mxu0 0.0
  %236 = vmatpush1.msra.mxu0 0.0
  %237 = vmatprep.subr.mxu0 0.0
  %238 = vmatpush1.msra.mxu0 0.0
  %239 = vmatprep.subr.mxu0 0.0
  %240 = vmatpush1.msra.mxu0 0.0
  %241 = vmatprep.subr.mxu0 0.0
  %242 = vmatpush1.msra.mxu0 0.0
  %243 = vmatprep.subr.mxu0 0.0
  %244 = vmatpush1.msra.mxu0 0.0
  %245 = vmatprep.subr.mxu0 0.0
  %246 = vmatpush1.msra.mxu0 0.0
  %247 = vmatprep.subr.mxu0 0.0
  %248 = vmatpush1.msra.mxu0 0.0
  %249 = vmatprep.subr.mxu0 0.0
  %250 = vmatpush1.msra.mxu0 0.0
  %251 = vmatprep.subr.mxu0 0.0
  %252 = vmatpush1.msra.mxu0 0.0
  %253 = vmatprep.subr.mxu0 0.0
  %254 = vmatpush1.msra.mxu0 0.0
  %255 = vmatprep.subr.mxu0 0.0
  %256 = vmatpush1.msra.mxu0 0.0
  %257 = vmatprep.subr.mxu0 0.0
  %258 = vmatpush1.msra.mxu0 0.0
  %259 = vmatprep.subr.mxu0 0.0
  %260 = vmatpush1.msra.mxu0 0.0
  %261 = vmatprep.subr.mxu0 0.0
  %262 = vmatpush1.msra.mxu0 0.0
  %263 = vmatprep.subr.mxu0 0.0
  %264 = vmatpush1.msra.mxu0 0.0
  %265 = vmatprep.subr.mxu0 0.0
  %266 = vmatpush1.msra.mxu0 0.0
  %267 = vmatprep.subr.mxu0 0.0
  %268 = vmatpush1.msra.mxu0 0.0
  %269 = vmatprep.subr.mxu0 0.0
  %270 = vmatpush1.msra.mxu0 0.0
  %271 = vmatprep.subr.mxu0 0.0
  %272 = vmatpush1.msra.mxu0 0.0
  %273 = vmatprep.subr.mxu0 0.0
  %274 = vmatpush1.msra.mxu0 0.0
  %275 = vmatprep.subr.mxu0 0.0
  %276 = vmatpush1.msra.mxu0 0.0
  %277 = vmatprep.subr.mxu0 0.0
  %278 = vmatpush1.msra.mxu0 0.0
  %279 = vmatprep.subr.mxu0 0.0
  %280 = vmatpush1.msra.mxu0 0.0
  %281 = vmatprep.subr.mxu0 0.0
  %282 = vmatpush1.msra.mxu0 0.0
  %283 = vmatprep.subr.mxu0 0.0
  %284 = vmatpush1.msra.mxu0 0.0
  %285 = vmatprep.subr.mxu0 0.0
  %286 = vmatpush1.msra.mxu0 0.0
  %287 = vmatprep.subr.mxu0 0.0
  %288 = vmatpush1.msra.mxu0 0.0
  %289 = vmatprep.mubr.f32.mxu0 0.0
  %290 = vmatmul.mubr.f32.gmra.mrb[0].mxu0 %v219
  %v291 = vpop.f32.mrb[0].mxu0
  %v292 = vadd.f32 %v215, %v291
  %v293 = vpop.f32.mrb[0].mxu0
  %294 = vdwg.mxu0
  %v295 = vxor.u32 %v292, 2147483648
  %v296 = vmul.f32 %v295, 1.442695
  %v297 = vpow.pop %v296
  %v298 = vadd.f32 %v297, 1.0
  %v299 = vrcp.pop %v298
  %v300 = vmul.f32 1.0, %v299
  %v301 = vlaneseq
  %v302 = vshrl.u32 %v301, 7
  %v303 = vsub.s32 0, %v302
  %v304 = vrot.slane %v300, %v303
  %306 = vbcast.lane.b32.xlu0 %v304, 256
  %v307 = vpop.permute.xlu0 %306
  %s309 = sor.u32 256, 8
  %310 = vbcast.lane.b32.xlu0 %v304, %s309
  %v311 = vpop.permute.xlu0 %310
  %s313 = sor.u32 256, 16
  %314 = vbcast.lane.b32.xlu0 %v304, %s313
  %v315 = vpop.permute.xlu0 %314
  %s317 = sor.u32 256, 24
  %318 = vbcast.lane.b32.xlu0 %v304, %s317
  %v319 = vpop.permute.xlu0 %318
  %v320 = vlaneseq
  %v321 = vshrl.u32 %v320, 7
  %v322 = vsub.s32 1, %v321
  %v323 = vrot.slane %v300, %v322
  %325 = vbcast.lane.b32.xlu0 %v323, 256
  %v326 = vpop.permute.xlu0 %325
  %s328 = sor.u32 256, 8
  %329 = vbcast.lane.b32.xlu0 %v323, %s328
  %v330 = vpop.permute.xlu0 %329
  %s332 = sor.u32 256, 16
  %333 = vbcast.lane.b32.xlu0 %v323, %s332
  %v334 = vpop.permute.xlu0 %333
  %s336 = sor.u32 256, 24
  %337 = vbcast.lane.b32.xlu0 %v323, %s336
  %v338 = vpop.permute.xlu0 %337
  %v339 = vmul.f32 %v20, %v307
  %v340 = vmul.f32 %v21, %v307
  %v341 = vmul.f32 %v22, %v311
  %v342 = vmul.f32 %v23, %v311
  %v343 = vmul.f32 %v24, %v315
  %v344 = vmul.f32 %v25, %v315
  %v345 = vmul.f32 %v26, %v319
  %v346 = vmul.f32 %v27, %v319
  %v347 = vmul.f32 %v28, %v326
  %v348 = vmul.f32 %v29, %v326
  %v349 = vmul.f32 %v30, %v330
  %v350 = vmul.f32 %v31, %v330
  %v351 = vmul.f32 %v32, %v334
  %v352 = vmul.f32 %v33, %v334
  %v353 = vmul.f32 %v34, %v338
  %v354 = vmul.f32 %v35, %v338
  %355 = vst [vmem:[%s5] sm:$0xff] %v339
  %356 = vst [vmem:[%s5 + $0x8] sm:$0xff] %v340
  %357 = vst [vmem:[%s5 + $0x10] sm:$0xff] %v341
  %358 = vst [vmem:[%s5 + $0x18] sm:$0xff] %v342
  %359 = vst [vmem:[%s5 + $0x20] sm:$0xff] %v343
  %360 = vst [vmem:[%s5 + $0x28] sm:$0xff] %v344
  %361 = vst [vmem:[%s5 + $0x30] sm:$0xff] %v345
  %362 = vst [vmem:[%s5 + $0x38] sm:$0xff] %v346
  %363 = vst [vmem:[%s5 + $0x40] sm:$0xff] %v347
  %364 = vst [vmem:[%s5 + $0x48] sm:$0xff] %v348
  %365 = vst [vmem:[%s5 + $0x50] sm:$0xff] %v349
  %366 = vst [vmem:[%s5 + $0x58] sm:$0xff] %v350
  %367 = vst [vmem:[%s5 + $0x60] sm:$0xff] %v351
  %368 = vst [vmem:[%s5 + $0x68] sm:$0xff] %v352
  %369 = vst [vmem:[%s5 + $0x70] sm:$0xff] %v353
  %370 = vst [vmem:[%s5 + $0x78] sm:$0xff] %v354
  // Predicated region
  $region22: #{se_block.1} parent=0 // pred_check
    _
  $region23: #{se_block.1} parent=0 // pred_check_branch
    %372 = sbr.rel (0) target = $region25
  $region24: #{se_block.1} parent=0 // pred_region
    _
  $region25: #{se_block.1} parent=0 // pred_fallthru
    _
  // Predicated region
  $region26: #{se_block.1} parent=0 // pred_check
    _
  $region27: #{se_block.1} parent=0 // pred_check_branch
    %374 = sbr.rel (0) target = $region29
  $region28: #{se_block.1} parent=0 // pred_region
    _
  $region29: #{se_block.1} parent=0 // pred_fallthru
    _

</llo_original>
